<compile_context>
chip_gen: v7x
topology: tpu7x:2x2x1
jax: 0.10.0
libtpu: 0.0.40
codegen_flags: <defaults>
</compile_context>

<pallas_src>
import functools

import jax
import jax.numpy as jnp
from jax import lax
from jax.experimental import pallas as pl
from jax.experimental.pallas import tpu as pltpu


def _round_up(a, m):
    return ((a + m - 1) // m) * m


def _plan_tiles(hw, c, elem_bytes, n_split):
    """C-aware and generation-aware spatial tiling.

    Each grid step loads a (C, T, 128) block per input (2 inputs x 2 pipeline
    buffers), so T is capped by the VMEM budget of the current generation.
    Returns (T, num_h_split, s_pad, vmem_limit_bytes) where the padded spatial
    extent is s_pad * 128 pixels split into n_split * num_h_split tiles.
    """
    s = -(-hw // 128)                            # sublanes of 128 pixels needed
    try:
        vmem_cap = int(pltpu.get_tpu_info().vmem_capacity_bytes)
    except Exception:
        vmem_cap = 64 * 1024 * 1024              # v7x per-TC VMEM (smallest gen)
    budget = int(vmem_cap * 0.6)                 # headroom for scratch/outputs
    t_cap = budget // (4 * c * 128 * elem_bytes)  # 2 inputs x 2 buffers
    t_cap = max(16, min((t_cap // 16) * 16, 2048))  # mult. of 16: ok for f32 & bf16
    s16 = _round_up(s, 16)
    t = s16 if s16 <= t_cap else t_cap
    num_h = _round_up(max(1, -(-s // t)), n_split)  # total spatial tiles
    num_h_split = num_h // n_split
    s_pad = num_h * t
    need = 4 * c * t * 128 * elem_bytes + (4 * c + 2) * 8 * 128 * 4
    vmem_limit = min(int(vmem_cap * 0.9), max(32 << 20, int(need * 1.5)))
    return t, num_h_split, s_pad, vmem_limit


def _combined_loss_kernel(x_ref, t_ref, ce_out, inter_out, pt_out,
                          ce_acc, inter_acc, pt_acc, *, hw_valid, apply_mask):
    s_idx = pl.program_id(1)
    h = pl.program_id(2)
    num_h = pl.num_programs(2)

    # Reset the (tiny) per-(sample, split) accumulators at the first tile.
    @pl.when(h == 0)
    def _():
        ce_acc[...] = jnp.zeros_like(ce_acc)
        inter_acc[...] = jnp.zeros_like(inter_acc)
        pt_acc[...] = jnp.zeros_like(pt_acc)

    x = x_ref[0].astype(jnp.float32)      # (C, T, 128) -- all math in f32
    t = t_ref[0].astype(jnp.float32)
    c, tt, ll = x.shape
    g = tt // 8                           # sublane groups per tile (static)

    # Channel softmax: with classes on the leading axis, max/sum over C are
    # elementwise ops across C lane-dense vreg slabs (pure VPU, no XLU).
    m = jnp.max(x, axis=0, keepdims=True)            # (1, T, 128)
    xs = x - m                                       # reused by exp and log_sm
    ex = jnp.exp(xs)
    denom = jnp.sum(ex, axis=0, keepdims=True)       # (1, T, 128)
    log_sm = xs - jnp.log(denom)                     # exact log for the CE path
    probs = ex * pl.reciprocal(denom, approx=True)   # EUP; feeds eps-reg IoU only

    def group_sum(a):
        # (C, T, 128) -> (C, 8, 128): fold sublane groups with plain vreg adds.
        acc = a[:, 0:8, :]
        for gi in range(1, g):
            acc = acc + a[:, gi * 8:(gi + 1) * 8, :]
        return acc

    # Per-step work: elementwise products folded into KB-scale partials.
    # `-=` avoids a per-element negate (no f32 FMA fusion to absorb it).
    ce_acc[...] -= jnp.sum(group_sum(t * log_sm), axis=0)     # (8, 128)
    inter_acc[...] += group_sum(probs * t)                    # (C, 8, 128)

    if apply_mask:
        # Only probs needs masking (padded targets are zero, so CE and the
        # intersection already vanish there).  Fully valid tiles skip it.
        tile_start = (s_idx * num_h + h) * (tt * ll)
        tile_has_pad = tile_start + tt * ll > hw_valid

        @pl.when(tile_has_pad)
        def _():
            sub = lax.broadcasted_iota(jnp.int32, (tt, ll), 0)
            lane = lax.broadcasted_iota(jnp.int32, (tt, ll), 1)
            pix = tile_start + sub * ll + lane
            probs_m = jnp.where((pix < hw_valid)[None, :, :], probs, 0.0)
            pt_acc[...] += group_sum(probs_m + t)

        @pl.when(jnp.logical_not(tile_has_pad))
        def _():
            pt_acc[...] += group_sum(probs + t)
    else:
        pt_acc[...] += group_sum(probs + t)

    # Finalize: just copy the tiny partials out once per (sample, split).
    @pl.when(h == num_h - 1)
    def _():
        ce_out[0, 0] = ce_acc[...]
        inter_out[0, 0] = inter_acc[...]
        pt_out[0, 0] = pt_acc[...]


def combined_loss(inputs_nchw, targets_nchw, weight_ce=1.0, weight_iou=1.0,
                  spatial_splits=None):
    """inputs/targets: (N, C, H, W) float arrays (targets are class probabilities).

    Feed bf16 inputs/targets (cast upstream) to halve HBM bytes; in-kernel math
    is f32 regardless of the input dtype.  Returns the scalar combined loss.
    """
    n, c, hgt, wid = inputs_nchw.shape
    hw = hgt * wid
    # Extra parallel split so both v7x TensorCores stay busy when N is tiny.
    n_split = spatial_splits if spatial_splits is not None else (2 if n < 2 else 1)

    elem_bytes = max(jnp.dtype(inputs_nchw.dtype).itemsize,
                     jnp.dtype(targets_nchw.dtype).itemsize)
    t_sub, num_h_split, s_pad, vmem_limit = _plan_tiles(hw, c, elem_bytes, n_split)
    hw_pad = s_pad * 128
    apply_mask = hw_pad != hw

    # Free reshape of the natural NCHW order; pad spatial tail only if needed.
    x = inputs_nchw.reshape(n, c, hw)
    t = targets_nchw.reshape(n, c, hw)
    if apply_mask:
        x = jnp.pad(x, ((0, 0), (0, 0), (0, hw_pad - hw)))
        t = jnp.pad(t, ((0, 0), (0, 0), (0, hw_pad - hw)))
    x = x.reshape(n, c, s_pad, 128)
    t = t.reshape(n, c, s_pad, 128)

    kernel = functools.partial(_combined_loss_kernel,
                               hw_valid=hw, apply_mask=apply_mask)

    in_spec = pl.BlockSpec((1, c, t_sub, 128),
                           lambda ni, si, hi: (ni, 0, si * num_h_split + hi, 0))
    ce_spec = pl.BlockSpec((1, 1, 8, 128), lambda ni, si, hi: (ni, si, 0, 0))
    cls_spec = pl.BlockSpec((1, 1, c, 8, 128), lambda ni, si, hi: (ni, si, 0, 0, 0))

    ce_p, inter_p, pt_p = pl.pallas_call(
        kernel,
        out_shape=(
            jax.ShapeDtypeStruct((n, n_split, 8, 128), jnp.float32),
            jax.ShapeDtypeStruct((n, n_split, c, 8, 128), jnp.float32),
            jax.ShapeDtypeStruct((n, n_split, c, 8, 128), jnp.float32),
        ),
        grid_spec=pltpu.PrefetchScalarGridSpec(
            num_scalar_prefetch=0,
            grid=(n, n_split, num_h_split),        # reduction axis last
            in_specs=[in_spec, in_spec],
            out_specs=[ce_spec, cls_spec, cls_spec],
            scratch_shapes=[
                pltpu.VMEM((8, 128), jnp.float32),       # CE partial
                pltpu.VMEM((c, 8, 128), jnp.float32),    # intersection partials
                pltpu.VMEM((c, 8, 128), jnp.float32),    # probs+targets partials
            ],
        ),
        compiler_params=pltpu.CompilerParams(
            dimension_semantics=("parallel", "parallel", "arbitrary"),
            vmem_limit_bytes=vmem_limit,
        ),
    )(x, t)

    # Trivial final combine on the tiny partial tensors.
    ce_mean = jnp.sum(ce_p) / jnp.float32(n * hw)
    inter_c = jnp.sum(inter_p, axis=(1, 3, 4))            # (N, C)
    union_c = jnp.sum(pt_p, axis=(1, 3, 4)) - inter_c     # (N, C)
    iou = (inter_c + 1e-6) / (union_c + 1e-6)
    iou_loss = 1.0 - jnp.mean(iou)
    return weight_ce * ce_mean + weight_iou * iou_loss


def _reference_combined_loss(inputs, targets, weight_ce=1.0, weight_iou=1.0):
    # Pure-JAX reference mirroring the PyTorch module (f32 math like the kernel).
    x = inputs.astype(jnp.float32)
    t = targets.astype(jnp.float32)
    logp = jax.nn.log_softmax(x, axis=1)
    ce = jnp.mean(jnp.sum(-t * logp, axis=1))              # mean over (N, H, W)
    probs = jax.nn.softmax(x, axis=1)
    inter = jnp.sum(probs * t, axis=(2, 3))
    union = jnp.sum(probs + t, axis=(2, 3)) - inter
    iou = (inter + 1e-6) / (union + 1e-6)
    iou_loss = 1.0 - jnp.mean(iou)
    return weight_ce * ce + weight_iou * iou_loss


if __name__ == "__main__":
    key = jax.random.PRNGKey(0)
    k1, k2 = jax.random.split(key)
    N, C, H, W = 2, 4, 16, 16

    inputs_f32 = jax.random.normal(k1, (N, C, H, W), dtype=jnp.float32)
    targets_f32 = jax.nn.softmax(
        jax.random.normal(k2, (N, C, H, W), dtype=jnp.float32) * 2.0, axis=1)
    # Feed bf16: halves the HBM bytes the kernel reads; kernel math stays f32.
    inputs = inputs_f32.astype(jnp.bfloat16)
    targets = targets_f32.astype(jnp.bfloat16)

    loss = combined_loss(inputs, targets, weight_ce=1.0, weight_iou=1.0)
    loss = jax.block_until_ready(loss)

    ref = _reference_combined_loss(inputs, targets)
    # approx reciprocal only perturbs the eps-regularized IoU term (O(1e-4));
    # the CE path uses the exact log.
    assert jnp.allclose(loss, ref, rtol=2e-3, atol=2e-3), (loss, ref)

    # Also exercise the explicit spatial split (v7x two-TC path for small N).
    loss_split = combined_loss(inputs, targets, spatial_splits=2)
    loss_split = jax.block_until_ready(loss_split)
    assert jnp.allclose(loss_split, ref, rtol=2e-3, atol=2e-3), (loss_split, ref)

    print("KERNEL_OK")
</pallas_src>

<mosaic_0001>
module attributes {stable_mosaic.version = 11 : i64} {
  func.func @_combined_loss_kernel(%arg0: i32, %arg1: i32, %arg2: i32, %arg3: memref<1x4x16x128xbf16, #tpu.memory_space<vmem>>, %arg4: memref<1x4x16x128xbf16, #tpu.memory_space<vmem>>, %arg5: memref<1x1x8x128xf32, #tpu.memory_space<vmem>>, %arg6: memref<1x1x4x8x128xf32, #tpu.memory_space<vmem>>, %arg7: memref<1x1x4x8x128xf32, #tpu.memory_space<vmem>>, %arg8: memref<8x128xf32, #tpu.memory_space<vmem>>, %arg9: memref<4x8x128xf32, #tpu.memory_space<vmem>>, %arg10: memref<4x8x128xf32, #tpu.memory_space<vmem>>) attributes {dimension_semantics = [#tpu.dimension_semantics<parallel>, #tpu.dimension_semantics<parallel>, #tpu.dimension_semantics<arbitrary>], iteration_bounds = array<i64: 2, 1, 1>, scalar_prefetch = 0 : i64, scratch_operands = 3 : i64, tpu.core_type = #tpu.core_type<tc>, window_params = [{transform_indices = @transform_0, window_bounds = array<i64: 1, 4, 16, 128>}, {transform_indices = @transform_1, window_bounds = array<i64: 1, 4, 16, 128>}, {transform_indices = @transform_2, window_bounds = array<i64: 1, 1, 8, 128>}, {transform_indices = @transform_3, window_bounds = array<i64: 1, 1, 4, 8, 128>}, {transform_indices = @transform_4, window_bounds = array<i64: 1, 1, 4, 8, 128>}]} {
    %c0_i32 = arith.constant 0 : i32
    %0 = arith.cmpi eq, %arg2, %c0_i32 : i32
    %1 = arith.extui %0 : i1 to i32
    %c0_i32_0 = arith.constant 0 : i32
    %2 = arith.cmpi ne, %1, %c0_i32_0 : i32
    scf.if %2 {
      %cst_25 = arith.constant 0.000000e+00 : f32
      %50 = vector.broadcast %cst_25 : f32 to vector<8x128xf32>
      %c0_26 = arith.constant 0 : index
      %c0_27 = arith.constant 0 : index
      %51 = vector.load %arg8[%c0_26, %c0_27] : memref<8x128xf32, #tpu.memory_space<vmem>>, vector<8x128xf32>
      tpu.vector_store %arg8[%c0_26, %c0_27], %50 {strides = array<i32>} : memref<8x128xf32, #tpu.memory_space<vmem>>, vector<8x128xf32>,
      %cst_28 = arith.constant 0.000000e+00 : f32
      %52 = vector.broadcast %cst_28 : f32 to vector<4x8x128xf32>
      %c0_29 = arith.constant 0 : index
      %c0_30 = arith.constant 0 : index
      %c0_31 = arith.constant 0 : index
      %53 = vector.load %arg9[%c0_29, %c0_30, %c0_31] : memref<4x8x128xf32, #tpu.memory_space<vmem>>, vector<4x8x128xf32>
      tpu.vector_store %arg9[%c0_29, %c0_30, %c0_31], %52 {strides = array<i32>} : memref<4x8x128xf32, #tpu.memory_space<vmem>>, vector<4x8x128xf32>,
      %cst_32 = arith.constant 0.000000e+00 : f32
      %54 = vector.broadcast %cst_32 : f32 to vector<4x8x128xf32>
      %c0_33 = arith.constant 0 : index
      %c0_34 = arith.constant 0 : index
      %c0_35 = arith.constant 0 : index
      %55 = vector.load %arg10[%c0_33, %c0_34, %c0_35] : memref<4x8x128xf32, #tpu.memory_space<vmem>>, vector<4x8x128xf32>
      tpu.vector_store %arg10[%c0_33, %c0_34, %c0_35], %54 {strides = array<i32>} : memref<4x8x128xf32, #tpu.memory_space<vmem>>, vector<4x8x128xf32>,
    } else {
    }
    %c0 = arith.constant 0 : index
    %c0_1 = arith.constant 0 : index
    %c0_2 = arith.constant 0 : index
    %c0_3 = arith.constant 0 : index
    %3 = vector.load %arg3[%c0, %c0_1, %c0_2, %c0_3] : memref<1x4x16x128xbf16, #tpu.memory_space<vmem>>, vector<1x4x16x128xbf16>
    %4 = vector.shape_cast %3 : vector<1x4x16x128xbf16> to vector<4x16x128xbf16>
    %5 = arith.extf %4 : vector<4x16x128xbf16> to vector<4x16x128xf32>
    %c0_4 = arith.constant 0 : index
    %c0_5 = arith.constant 0 : index
    %c0_6 = arith.constant 0 : index
    %c0_7 = arith.constant 0 : index
    %6 = vector.load %arg4[%c0_4, %c0_5, %c0_6, %c0_7] : memref<1x4x16x128xbf16, #tpu.memory_space<vmem>>, vector<1x4x16x128xbf16>
    %7 = vector.shape_cast %6 : vector<1x4x16x128xbf16> to vector<4x16x128xbf16>
    %8 = arith.extf %7 : vector<4x16x128xbf16> to vector<4x16x128xf32>
    %cst = arith.constant dense<0xFF800000> : vector<16x128xf32>
    %9 = vector.multi_reduction <maximumf>, %5, %cst [0] : vector<4x16x128xf32> to vector<16x128xf32>
    %10 = vector.shape_cast %9 : vector<16x128xf32> to vector<1x16x128xf32>
    %11 = vector.broadcast %10 : vector<1x16x128xf32> to vector<4x16x128xf32>
    %12 = arith.subf %5, %11 : vector<4x16x128xf32>
    %13 = math.exp %12 : vector<4x16x128xf32>
    %cst_8 = arith.constant dense<0.000000e+00> : vector<16x128xf32>
    %14 = vector.multi_reduction <add>, %13, %cst_8 [0] : vector<4x16x128xf32> to vector<16x128xf32>
    %15 = vector.shape_cast %14 : vector<16x128xf32> to vector<1x16x128xf32>
    %16 = math.log %15 : vector<1x16x128xf32>
    %17 = vector.broadcast %16 : vector<1x16x128xf32> to vector<4x16x128xf32>
    %18 = arith.subf %12, %17 : vector<4x16x128xf32>
    %19 = tpu.reciprocal %15 {approx = true} : vector<1x16x128xf32> -> vector<1x16x128xf32>
    %20 = vector.broadcast %19 : vector<1x16x128xf32> to vector<4x16x128xf32>
    %21 = arith.mulf %13, %20 : vector<4x16x128xf32>
    %c0_9 = arith.constant 0 : index
    %c0_10 = arith.constant 0 : index
    %22 = vector.load %arg8[%c0_9, %c0_10] : memref<8x128xf32, #tpu.memory_space<vmem>>, vector<8x128xf32>
    %23 = arith.mulf %8, %18 : vector<4x16x128xf32>
    %24 = vector.extract_strided_slice %23 {offsets = [0, 0, 0], sizes = [4, 8, 128], strides = [1, 1, 1]} : vector<4x16x128xf32> to vector<4x8x128xf32>
    %25 = vector.extract_strided_slice %23 {offsets = [0, 8, 0], sizes = [4, 8, 128], strides = [1, 1, 1]} : vector<4x16x128xf32> to vector<4x8x128xf32>
    %26 = arith.addf %24, %25 : vector<4x8x128xf32>
    %cst_11 = arith.constant dense<0.000000e+00> : vector<8x128xf32>
    %27 = vector.multi_reduction <add>, %26, %cst_11 [0] : vector<4x8x128xf32> to vector<8x128xf32>
    %28 = arith.subf %22, %27 : vector<8x128xf32>
    %c0_12 = arith.constant 0 : index
    %c0_13 = arith.constant 0 : index
    %29 = vector.load %arg8[%c0_12, %c0_13] : memref<8x128xf32, #tpu.memory_space<vmem>>, vector<8x128xf32>
    tpu.vector_store %arg8[%c0_12, %c0_13], %28 {strides = array<i32>} : memref<8x128xf32, #tpu.memory_space<vmem>>, vector<8x128xf32>,
    %c0_14 = arith.constant 0 : index
    %c0_15 = arith.constant 0 : index
    %c0_16 = arith.constant 0 : index
    %30 = vector.load %arg9[%c0_14, %c0_15, %c0_16] : memref<4x8x128xf32, #tpu.memory_space<vmem>>, vector<4x8x128xf32>
    %31 = arith.mulf %21, %8 : vector<4x16x128xf32>
    %32 = vector.extract_strided_slice %31 {offsets = [0, 0, 0], sizes = [4, 8, 128], strides = [1, 1, 1]} : vector<4x16x128xf32> to vector<4x8x128xf32>
    %33 = vector.extract_strided_slice %31 {offsets = [0, 8, 0], sizes = [4, 8, 128], strides = [1, 1, 1]} : vector<4x16x128xf32> to vector<4x8x128xf32>
    %34 = arith.addf %32, %33 : vector<4x8x128xf32>
    %35 = arith.addf %30, %34 : vector<4x8x128xf32>
    %c0_17 = arith.constant 0 : index
    %c0_18 = arith.constant 0 : index
    %c0_19 = arith.constant 0 : index
    %36 = vector.load %arg9[%c0_17, %c0_18, %c0_19] : memref<4x8x128xf32, #tpu.memory_space<vmem>>, vector<4x8x128xf32>
    tpu.vector_store %arg9[%c0_17, %c0_18, %c0_19], %35 {strides = array<i32>} : memref<4x8x128xf32, #tpu.memory_space<vmem>>, vector<4x8x128xf32>,
    %c1_i32 = arith.constant 1 : i32
    %37 = arith.muli %arg1, %c1_i32 : i32
    %38 = arith.addi %37, %arg2 : i32
    %c2048_i32 = arith.constant 2048 : i32
    %39 = arith.muli %38, %c2048_i32 : i32
    %c2048_i32_20 = arith.constant 2048 : i32
    %40 = arith.addi %39, %c2048_i32_20 : i32
    %c256_i32 = arith.constant 256 : i32
    %41 = arith.cmpi sgt, %40, %c256_i32 : i32
    %42 = arith.extui %41 : i1 to i32
    %c0_i32_21 = arith.constant 0 : i32
    %43 = arith.cmpi ne, %42, %c0_i32_21 : i32
    scf.if %43 {
      %50 = tpu.iota {dimensions = array<i32: 0>} : vector<16x128xi32>
      %51 = tpu.iota {dimensions = array<i32: 1>} : vector<16x128xi32>
      %c128_i32 = arith.constant 128 : i32
      %52 = vector.broadcast %c128_i32 : i32 to vector<16x128xi32>
      %53 = arith.muli %50, %52 : vector<16x128xi32>
      %54 = vector.broadcast %39 : i32 to vector<16x128xi32>
      %55 = arith.addi %54, %53 : vector<16x128xi32>
      %56 = arith.addi %55, %51 : vector<16x128xi32>
      %c256_i32_25 = arith.constant 256 : i32
      %57 = vector.broadcast %c256_i32_25 : i32 to vector<16x128xi32>
      %58 = arith.cmpi slt, %56, %57 : vector<16x128xi32>
      %59 = vector.shape_cast %58 : vector<16x128xi1> to vector<1x16x128xi1>
      %cst_26 = arith.constant 0.000000e+00 : f32
      %60 = vector.shape_cast %59 : vector<1x16x128xi1> to vector<1x16x128xi1>
      %61 = vector.broadcast %60 : vector<1x16x128xi1> to vector<4x16x128xi1>
      %62 = vector.broadcast %cst_26 : f32 to vector<4x16x128xf32>
      %63 = arith.select %61, %21, %62 : vector<4x16x128xi1>, vector<4x16x128xf32>
      %c0_27 = arith.constant 0 : index
      %c0_28 = arith.constant 0 : index
      %c0_29 = arith.constant 0 : index
      %64 = vector.load %arg10[%c0_27, %c0_28, %c0_29] : memref<4x8x128xf32, #tpu.memory_space<vmem>>, vector<4x8x128xf32>
      %65 = arith.addf %63, %8 : vector<4x16x128xf32>
      %66 = vector.extract_strided_slice %65 {offsets = [0, 0, 0], sizes = [4, 8, 128], strides = [1, 1, 1]} : vector<4x16x128xf32> to vector<4x8x128xf32>
      %67 = vector.extract_strided_slice %65 {offsets = [0, 8, 0], sizes = [4, 8, 128], strides = [1, 1, 1]} : vector<4x16x128xf32> to vector<4x8x128xf32>
      %68 = arith.addf %66, %67 : vector<4x8x128xf32>
      %69 = arith.addf %64, %68 : vector<4x8x128xf32>
      %c0_30 = arith.constant 0 : index
      %c0_31 = arith.constant 0 : index
      %c0_32 = arith.constant 0 : index
      %70 = vector.load %arg10[%c0_30, %c0_31, %c0_32] : memref<4x8x128xf32, #tpu.memory_space<vmem>>, vector<4x8x128xf32>
      tpu.vector_store %arg10[%c0_30, %c0_31, %c0_32], %69 {strides = array<i32>} : memref<4x8x128xf32, #tpu.memory_space<vmem>>, vector<4x8x128xf32>,
    } else {
    }
    %true = arith.constant true
    %44 = arith.xori %41, %true : i1
    %45 = arith.extui %44 : i1 to i32
    %c0_i32_22 = arith.constant 0 : i32
    %46 = arith.cmpi ne, %45, %c0_i32_22 : i32
    scf.if %46 {
      %c0_25 = arith.constant 0 : index
      %c0_26 = arith.constant 0 : index
      %c0_27 = arith.constant 0 : index
      %50 = vector.load %arg10[%c0_25, %c0_26, %c0_27] : memref<4x8x128xf32, #tpu.memory_space<vmem>>, vector<4x8x128xf32>
      %51 = arith.addf %21, %8 : vector<4x16x128xf32>
      %52 = vector.extract_strided_slice %51 {offsets = [0, 0, 0], sizes = [4, 8, 128], strides = [1, 1, 1]} : vector<4x16x128xf32> to vector<4x8x128xf32>
      %53 = vector.extract_strided_slice %51 {offsets = [0, 8, 0], sizes = [4, 8, 128], strides = [1, 1, 1]} : vector<4x16x128xf32> to vector<4x8x128xf32>
      %54 = arith.addf %52, %53 : vector<4x8x128xf32>
      %55 = arith.addf %50, %54 : vector<4x8x128xf32>
      %c0_28 = arith.constant 0 : index
      %c0_29 = arith.constant 0 : index
      %c0_30 = arith.constant 0 : index
      %56 = vector.load %arg10[%c0_28, %c0_29, %c0_30] : memref<4x8x128xf32, #tpu.memory_space<vmem>>, vector<4x8x128xf32>
      tpu.vector_store %arg10[%c0_28, %c0_29, %c0_30], %55 {strides = array<i32>} : memref<4x8x128xf32, #tpu.memory_space<vmem>>, vector<4x8x128xf32>,
    } else {
    }
    %c0_i32_23 = arith.constant 0 : i32
    %47 = arith.cmpi eq, %arg2, %c0_i32_23 : i32
    %48 = arith.extui %47 : i1 to i32
    %c0_i32_24 = arith.constant 0 : i32
    %49 = arith.cmpi ne, %48, %c0_i32_24 : i32
    scf.if %49 {
      %c0_25 = arith.constant 0 : index
      %c0_26 = arith.constant 0 : index
      %50 = vector.load %arg8[%c0_25, %c0_26] : memref<8x128xf32, #tpu.memory_space<vmem>>, vector<8x128xf32>
      %c0_27 = arith.constant 0 : index
      %c0_28 = arith.constant 0 : index
      %c0_29 = arith.constant 0 : index
      %c0_30 = arith.constant 0 : index
      %51 = vector.load %arg5[%c0_27, %c0_28, %c0_29, %c0_30] : memref<1x1x8x128xf32, #tpu.memory_space<vmem>>, vector<1x1x8x128xf32>
      %52 = vector.shape_cast %51 : vector<1x1x8x128xf32> to vector<8x128xf32>
      %53 = vector.shape_cast %50 : vector<8x128xf32> to vector<1x1x8x128xf32>
      tpu.vector_store %arg5[%c0_27, %c0_28, %c0_29, %c0_30], %53 {strides = array<i32>} : memref<1x1x8x128xf32, #tpu.memory_space<vmem>>, vector<1x1x8x128xf32>,
      %c0_31 = arith.constant 0 : index
      %c0_32 = arith.constant 0 : index
      %c0_33 = arith.constant 0 : index
      %54 = vector.load %arg9[%c0_31, %c0_32, %c0_33] : memref<4x8x128xf32, #tpu.memory_space<vmem>>, vector<4x8x128xf32>
      %c0_34 = arith.constant 0 : index
      %c0_35 = arith.constant 0 : index
      %c0_36 = arith.constant 0 : index
      %c0_37 = arith.constant 0 : index
      %c0_38 = arith.constant 0 : index
      %55 = vector.load %arg6[%c0_34, %c0_35, %c0_36, %c0_37, %c0_38] : memref<1x1x4x8x128xf32, #tpu.memory_space<vmem>>, vector<1x1x4x8x128xf32>
      %56 = vector.shape_cast %55 : vector<1x1x4x8x128xf32> to vector<4x8x128xf32>
      %57 = vector.shape_cast %54 : vector<4x8x128xf32> to vector<1x1x4x8x128xf32>
      tpu.vector_store %arg6[%c0_34, %c0_35, %c0_36, %c0_37, %c0_38], %57 {strides = array<i32>} : memref<1x1x4x8x128xf32, #tpu.memory_space<vmem>>, vector<1x1x4x8x128xf32>,
      %c0_39 = arith.constant 0 : index
      %c0_40 = arith.constant 0 : index
      %c0_41 = arith.constant 0 : index
      %58 = vector.load %arg10[%c0_39, %c0_40, %c0_41] : memref<4x8x128xf32, #tpu.memory_space<vmem>>, vector<4x8x128xf32>
      %c0_42 = arith.constant 0 : index
      %c0_43 = arith.constant 0 : index
      %c0_44 = arith.constant 0 : index
      %c0_45 = arith.constant 0 : index
      %c0_46 = arith.constant 0 : index
      %59 = vector.load %arg7[%c0_42, %c0_43, %c0_44, %c0_45, %c0_46] : memref<1x1x4x8x128xf32, #tpu.memory_space<vmem>>, vector<1x1x4x8x128xf32>
      %60 = vector.shape_cast %59 : vector<1x1x4x8x128xf32> to vector<4x8x128xf32>
      %61 = vector.shape_cast %58 : vector<4x8x128xf32> to vector<1x1x4x8x128xf32>
      tpu.vector_store %arg7[%c0_42, %c0_43, %c0_44, %c0_45, %c0_46], %61 {strides = array<i32>} : memref<1x1x4x8x128xf32, #tpu.memory_space<vmem>>, vector<1x1x4x8x128xf32>,
    } else {
    }
    return
  }
  func.func @transform_0(%arg0: i32, %arg1: i32, %arg2: i32) -> (i32, i32, i32, i32) {
    %c1_i32 = arith.constant 1 : i32
    %0 = arith.muli %arg1, %c1_i32 : i32
    %1 = arith.addi %0, %arg2 : i32
    %c0_i32 = arith.constant 0 : i32
    %c0_i32_0 = arith.constant 0 : i32
    %c0_i32_1 = arith.constant 0 : i32
    return %arg0, %c0_i32, %1, %c0_i32_0 : i32, i32, i32, i32
  }
  func.func @transform_1(%arg0: i32, %arg1: i32, %arg2: i32) -> (i32, i32, i32, i32) {
    %c1_i32 = arith.constant 1 : i32
    %0 = arith.muli %arg1, %c1_i32 : i32
    %1 = arith.addi %0, %arg2 : i32
    %c0_i32 = arith.constant 0 : i32
    %c0_i32_0 = arith.constant 0 : i32
    %c0_i32_1 = arith.constant 0 : i32
    return %arg0, %c0_i32, %1, %c0_i32_0 : i32, i32, i32, i32
  }
  func.func @transform_2(%arg0: i32, %arg1: i32, %arg2: i32) -> (i32, i32, i32, i32) {
    %c0_i32 = arith.constant 0 : i32
    %c0_i32_0 = arith.constant 0 : i32
    %c0_i32_1 = arith.constant 0 : i32
    return %arg0, %arg1, %c0_i32, %c0_i32_0 : i32, i32, i32, i32
  }
  func.func @transform_3(%arg0: i32, %arg1: i32, %arg2: i32) -> (i32, i32, i32, i32, i32) {
    %c0_i32 = arith.constant 0 : i32
    %c0_i32_0 = arith.constant 0 : i32
    %c0_i32_1 = arith.constant 0 : i32
    %c0_i32_2 = arith.constant 0 : i32
    return %arg0, %arg1, %c0_i32, %c0_i32_0, %c0_i32_1 : i32, i32, i32, i32, i32
  }
  func.func @transform_4(%arg0: i32, %arg1: i32, %arg2: i32) -> (i32, i32, i32, i32, i32) {
    %c0_i32 = arith.constant 0 : i32
    %c0_i32_0 = arith.constant 0 : i32
    %c0_i32_1 = arith.constant 0 : i32
    %c0_i32_2 = arith.constant 0 : i32
    return %arg0, %arg1, %c0_i32, %c0_i32_0, %c0_i32_1 : i32, i32, i32, i32, i32
  }
}

</mosaic_0001>

<llo_original>
// kernel: tpu_custom_call.1
$region0: #{tpu_custom_call.1}
  #allocation0 [shape = 'u32[]', space=smem, size = 0x4, offset = 0x4, fixed_abs, tag = 'smem constant byte address 0x4 - core index']
  #allocation1 [shape = 'u32[144,128]{1,0:T(1,128)}', space=vmem, size = 0x12000, scoped, tag = 'internal scratch']
  #allocation2 [shape = 'f32[8,128]{1,0:T(8,128)}', space=vmem, size = 0x1000, scoped, tag = 'scratch operand']
  #allocation3 [shape = 'f32[4,8,128]{2,1,0:T(8,128)}', space=vmem, size = 0x4000, scoped, tag = 'scratch operand']
  #allocation4 [shape = 'f32[4,8,128]{2,1,0:T(8,128)}', space=vmem, size = 0x4000, scoped, tag = 'scratch operand']
  %s0 = inlined_call_operand.hbm [shape: bf16[2,4,16,128], index: 0, kind: input, shape index: {}]
  %s1 = inlined_call_operand.hbm [shape: bf16[2,4,16,128], index: 1, kind: input, shape index: {}]
  %s2 = inlined_call_operand.hbm [shape: f32[2,1,8,128], index: 2, kind: output, shape index: {0}]
  %s3 = inlined_call_operand.hbm [shape: f32[2,1,4,8,128], index: 3, kind: output, shape index: {1}]
  %s4 = inlined_call_operand.hbm [shape: f32[2,1,4,8,128], index: 4, kind: output, shape index: {2}]
  %5 = xla_tuple %s2, %s3, %s4
  %s6 = sld [smem:[#allocation0]]
  $region81: #{tpu_custom_call.1} parent=0
    _
  %s8 = ssub.s32 1, %s6
  %s9 = scalar_select 0, %s8, %s6
  $region1: #{tpu_custom_call.1} parent=0
    #allocation5 [shape = 'u8[32768]{0}', space=vmem, size = 0x8000, scoped, tag = 'input window, operand 0']
    #allocation6 [shape = 's32[2]{0}', space=sflag, size = 0x8, scoped, tag = 'scoped memory for tpu_custom_call.1']
    #allocation7 [shape = 's32[2]{0}', space=sflag, size = 0x8, scoped, tag = 'scoped memory for tpu_custom_call.1']
    #allocation8 [shape = 'u8[32768]{0}', space=vmem, size = 0x8000, scoped, tag = 'input window, operand 1']
    #allocation9 [shape = 's32[2]{0}', space=sflag, size = 0x8, scoped, tag = 'scoped memory for tpu_custom_call.1']
    #allocation10 [shape = 'u8[8192]{0}', space=vmem, size = 0x2000, scoped, tag = 'output window, operand 0']
    #allocation11 [shape = 'u8[32768]{0}', space=vmem, size = 0x8000, scoped, tag = 'output window, operand 1']
    #allocation12 [shape = 's32[2]{0}', space=sflag, size = 0x8, scoped, tag = 'scoped memory for tpu_custom_call.1']
    #allocation13 [shape = 'u8[32768]{0}', space=vmem, size = 0x8000, scoped, tag = 'output window, operand 2']
    %10 = vsyncpa [#allocation6], 0
    %s11 = scalar_lea.sflag [#allocation6], 1
    %12 = vsyncpa %s11, 0
    %13 = vsyncpa [#allocation9], 0
    %s14 = scalar_lea.sflag [#allocation9], 1
    %15 = vsyncpa %s14, 0
    %16 = vsyncpa [#allocation7], 0
    %s17 = scalar_lea.sflag [#allocation7], 1
    %18 = vsyncpa %s17, 0
    %19 = vsyncpa [#allocation12], 0
    %s20 = scalar_lea.sflag [#allocation12], 1
    %21 = vsyncpa %s20, 0
    loop: start=0, step=1, limit=4
    $region2: #{tpu_custom_call.1} parent=1 // loop_pre_header
      _
    $region3: #{tpu_custom_call.1} parent=1 // loop_header
      %s23 = sphi 0, %s27
      %p24 = scmp.ge.s32.totalorder %s23, 4
      %s30 = sphi 0, %s49
      %s31 = sphi 0, %s45
      %s32 = sphi 0, %s41
      %s33 = sphi 0, %s30
      %s34 = sphi 0, %s31
      %s35 = sphi 0, %s32
      %s36 = sphi 0, %s33
      %s37 = sphi 0, %s34
      %s38 = sphi 0, %s35
      %s56 = sphi 0, %s58
      %s59 = sphi 0, %s56
      %s60 = sphi 0, %s59
      %s76 = sphi 0, %s60
      %s86 = sphi 0, %s88
      %s89 = sphi 0, %s86
      %s90 = sphi 0, %s89
      %s106 = sphi 0, %s90
      %s114 = sphi 0, %s116
      %s117 = sphi 0, %s114
      %s118 = sphi 0, %s117
      %s134 = sphi 0, %s118
      %s142 = sphi 0, %s144
      %s145 = sphi 0, %s142
      %s146 = sphi 0, %s145
      %s162 = sphi 0, %s146
      %s170 = sphi 0, %s172
      %s173 = sphi 0, %s170
      %s174 = sphi 0, %s173
      %s190 = sphi 0, %s174
    $region4: #{tpu_custom_call.1} parent=1 // loop_header_branch
      %26 = sbr.rel (%p24) target = $region8
    $region5: #{tpu_custom_call.1} parent=1 // loop_body
      %s28 = ssub.s32 %s23, 1
      %s29 = ssub.s32 %s23, 2
      %s39 = sadd.s32 1, %s32
      %p40 = scmp.ge.s32.totalorder %s39, 1
      %s41 = scalar_select %p40, 0, %s39
      %s42 = sadd.s32 1, %s31
      %s43 = scalar_select %p40, %s42, %s31
      %p44 = scmp.ge.s32.totalorder %s43, 1
      %s45 = scalar_select %p44, 0, %s43
      %s46 = sadd.s32 1, %s30
      %s47 = scalar_select %p44, %s46, %s30
      %p48 = scmp.ge.s32.totalorder %s47, 2
      %s49 = scalar_select %p48, 0, %s47
      %s50 = sadd.s32 %s31, %s32
      %s51 = sadd.s32 %s45, %s41
      %s52 = ssub.s32 %s30, %s49
      %s53 = ssub.s32 %s50, %s51
      %s54 = sor.u32 %s52, %s53
      %p55 = scmp.eq.s32.totalorder %s54, 0
      %s57 = sadd.s32 %s56, 1
      %s58 = scalar_select %p55, %s56, %s57
      %p61 = pneg %p55
      %p62 = scmp.eq.s32.totalorder %s23, 1
      %p63 = por %p61, %p62
      %p64 = scmp.ne.s32.totalorder %s56, %s59
      %p65 = scmp.eq.s32.totalorder %s23, 0
      %p66 = por %p64, %p65
      %p67 = scmp.ne.s32.totalorder %s56, %s59
      %p68 = scmp.eq.s32.totalorder %s28, 1
      %p69 = por %p67, %p68
      %p70 = scmp.ne.s32.totalorder %s59, %s60
      %p71 = scmp.eq.s32.totalorder %s28, 0
      %p72 = por %p70, %p71
      %p73 = scmp.ne.s32.totalorder %s59, %s60
      %p74 = scmp.eq.s32.totalorder %s29, 1
      %p75 = por %p73, %p74
      %p77 = scmp.ne.s32.totalorder %s60, %s76
      %p78 = scmp.eq.s32.totalorder %s29, 0
      %p79 = por %p77, %p78
      %s80 = sadd.s32 %s31, %s32
      %s81 = sadd.s32 %s45, %s41
      %s82 = ssub.s32 %s30, %s49
      %s83 = ssub.s32 %s80, %s81
      %s84 = sor.u32 %s82, %s83
      %p85 = scmp.eq.s32.totalorder %s84, 0
      %s87 = sadd.s32 %s86, 1
      %s88 = scalar_select %p85, %s86, %s87
      %p91 = pneg %p85
      %p92 = scmp.eq.s32.totalorder %s23, 1
      %p93 = por %p91, %p92
      %p94 = scmp.ne.s32.totalorder %s86, %s89
      %p95 = scmp.eq.s32.totalorder %s23, 0
      %p96 = por %p94, %p95
      %p97 = scmp.ne.s32.totalorder %s86, %s89
      %p98 = scmp.eq.s32.totalorder %s28, 1
      %p99 = por %p97, %p98
      %p100 = scmp.ne.s32.totalorder %s89, %s90
      %p101 = scmp.eq.s32.totalorder %s28, 0
      %p102 = por %p100, %p101
      %p103 = scmp.ne.s32.totalorder %s89, %s90
      %p104 = scmp.eq.s32.totalorder %s29, 1
      %p105 = por %p103, %p104
      %p107 = scmp.ne.s32.totalorder %s90, %s106
      %p108 = scmp.eq.s32.totalorder %s29, 0
      %p109 = por %p107, %p108
      %s110 = ssub.s32 %s30, %s49
      %s111 = ssub.s32 %s31, %s45
      %s112 = sor.u32 %s110, %s111
      %p113 = scmp.eq.s32.totalorder %s112, 0
      %s115 = sadd.s32 %s114, 1
      %s116 = scalar_select %p113, %s114, %s115
      %p119 = pneg %p113
      %p120 = scmp.eq.s32.totalorder %s23, 1
      %p121 = por %p119, %p120
      %p122 = scmp.ne.s32.totalorder %s114, %s117
      %p123 = scmp.eq.s32.totalorder %s23, 0
      %p124 = por %p122, %p123
      %p125 = scmp.ne.s32.totalorder %s114, %s117
      %p126 = scmp.eq.s32.totalorder %s28, 1
      %p127 = por %p125, %p126
      %p128 = scmp.ne.s32.totalorder %s117, %s118
      %p129 = scmp.eq.s32.totalorder %s28, 0
      %p130 = por %p128, %p129
      %p131 = scmp.ne.s32.totalorder %s117, %s118
      %p132 = scmp.eq.s32.totalorder %s29, 1
      %p133 = por %p131, %p132
      %p135 = scmp.ne.s32.totalorder %s118, %s134
      %p136 = scmp.eq.s32.totalorder %s29, 0
      %p137 = por %p135, %p136
      %s138 = ssub.s32 %s30, %s49
      %s139 = ssub.s32 %s31, %s45
      %s140 = sor.u32 %s138, %s139
      %p141 = scmp.eq.s32.totalorder %s140, 0
      %s143 = sadd.s32 %s142, 1
      %s144 = scalar_select %p141, %s142, %s143
      %p147 = pneg %p141
      %p148 = scmp.eq.s32.totalorder %s23, 1
      %p149 = por %p147, %p148
      %p150 = scmp.ne.s32.totalorder %s142, %s145
      %p151 = scmp.eq.s32.totalorder %s23, 0
      %p152 = por %p150, %p151
      %p153 = scmp.ne.s32.totalorder %s142, %s145
      %p154 = scmp.eq.s32.totalorder %s28, 1
      %p155 = por %p153, %p154
      %p156 = scmp.ne.s32.totalorder %s145, %s146
      %p157 = scmp.eq.s32.totalorder %s28, 0
      %p158 = por %p156, %p157
      %p159 = scmp.ne.s32.totalorder %s145, %s146
      %p160 = scmp.eq.s32.totalorder %s29, 1
      %p161 = por %p159, %p160
      %p163 = scmp.ne.s32.totalorder %s146, %s162
      %p164 = scmp.eq.s32.totalorder %s29, 0
      %p165 = por %p163, %p164
      %s166 = ssub.s32 %s30, %s49
      %s167 = ssub.s32 %s31, %s45
      %s168 = sor.u32 %s166, %s167
      %p169 = scmp.eq.s32.totalorder %s168, 0
      %s171 = sadd.s32 %s170, 1
      %s172 = scalar_select %p169, %s170, %s171
      %p175 = pneg %p169
      %p176 = scmp.eq.s32.totalorder %s23, 1
      %p177 = por %p175, %p176
      %p178 = scmp.ne.s32.totalorder %s170, %s173
      %p179 = scmp.eq.s32.totalorder %s23, 0
      %p180 = por %p178, %p179
      %p181 = scmp.ne.s32.totalorder %s170, %s173
      %p182 = scmp.eq.s32.totalorder %s28, 1
      %p183 = por %p181, %p182
      %p184 = scmp.ne.s32.totalorder %s173, %s174
      %p185 = scmp.eq.s32.totalorder %s28, 0
      %p186 = por %p184, %p185
      %p187 = scmp.ne.s32.totalorder %s173, %s174
      %p188 = scmp.eq.s32.totalorder %s29, 1
      %p189 = por %p187, %p188
      %p191 = scmp.ne.s32.totalorder %s174, %s190
      %p192 = scmp.eq.s32.totalorder %s29, 0
      %p193 = por %p191, %p192
      %p194 = scmp.le.s32.totalorder 1, %s23
      %p195 = scmp.lt.s32.totalorder %s23, 3
      %p196 = pnand %p194, %p195
      %p197 = pneg %p196
      // Predicated region
      $region9: #{tpu_custom_call.1} parent=5 // pred_check
        _
      $region10: #{tpu_custom_call.1} parent=5 // pred_check_branch
        %199 = sbr.rel (%p196) target = $region12
      $region11: #{tpu_custom_call.1} parent=5 // pred_region
        %s200 = ssub.s32 %s23, 1
      $region12: #{tpu_custom_call.1} parent=5 // pred_fallthru
        _
      %p201 = scmp.lt.s32.totalorder %s23, 2
      // Predicated region
      $region13: #{tpu_custom_call.1} parent=5 // pred_check
        %p202 = pneg %p201
      $region14: #{tpu_custom_call.1} parent=5 // pred_check_branch
        %204 = sbr.rel (%p202) target = $region16
      $region15: #{tpu_custom_call.1} parent=5 // pred_region
        // Predicated region
        $region17: #{tpu_custom_call.1} parent=15 // pred_check
          %p205 = pneg %p66
        $region18: #{tpu_custom_call.1} parent=15 // pred_check_branch
          %207 = sbr.rel (%p205) target = $region20
        $region19: #{tpu_custom_call.1} parent=15 // pred_region
          %s208 = sand.u32 %s56, 1
          %s209 = scalar_lea.sflag [#allocation6], %s208
          %s210 = sand.u32 %s56, 1
          %s211 = smul.addr %s210, 32
          %s212 = scalar_lea.vmem [#allocation5], %s211
          %s213 = sadd.s32 %s31, %s32
          %s214 = smul.u32 2, %s213
          %s216 = ssub.s32 512, 512
          %217 = vsyncadd %s209, %s216
          %s218 = smul.addr %s30, 8
          %s219 = sadd.s32 %s214, %s218
          %s220 = smul.addr %s219, 64
          %s221 = scalar_lea.hbm %s0, %s220
          %s222 = sshll.u32 %s212, 4
          %s223 = int_to_ptr.vmem [resolvable:$true] %s222
          %228 = dma.hbm_to_vmem [thread:$0]  %s221, 512, %s223, %s209, 64, 64, 4
        $region20: #{tpu_custom_call.1} parent=15 // pred_fallthru
          _
        // Predicated region
        $region21: #{tpu_custom_call.1} parent=15 // pred_check
          %p229 = pneg %p96
        $region22: #{tpu_custom_call.1} parent=15 // pred_check_branch
          %231 = sbr.rel (%p229) target = $region24
        $region23: #{tpu_custom_call.1} parent=15 // pred_region
          %s232 = sand.u32 %s86, 1
          %s233 = scalar_lea.sflag [#allocation9], %s232
          %s234 = sand.u32 %s86, 1
          %s235 = smul.addr %s234, 32
          %s236 = scalar_lea.vmem [#allocation8], %s235
          %s237 = sadd.s32 %s31, %s32
          %s238 = smul.u32 2, %s237
          %s240 = ssub.s32 512, 512
          %241 = vsyncadd %s233, %s240
          %s242 = smul.addr %s30, 8
          %s243 = sadd.s32 %s238, %s242
          %s244 = smul.addr %s243, 64
          %s245 = scalar_lea.hbm %s1, %s244
          %s246 = sshll.u32 %s236, 4
          %s247 = int_to_ptr.vmem [resolvable:$true] %s246
          %252 = dma.hbm_to_vmem [thread:$0]  %s245, 512, %s247, %s233, 64, 64, 4
        $region24: #{tpu_custom_call.1} parent=15 // pred_fallthru
          _
      $region16: #{tpu_custom_call.1} parent=5 // pred_fallthru
        _
      %p253 = scmp.le.s32.totalorder 1, %s23
      %p254 = scmp.lt.s32.totalorder %s23, 3
      %p255 = pnand %p253, %p254
      %p256 = pneg %p255
      // Predicated region
      $region25: #{tpu_custom_call.1} parent=5 // pred_check
        _
      $region26: #{tpu_custom_call.1} parent=5 // pred_check_branch
        %258 = sbr.rel (%p255) target = $region28
      $region27: #{tpu_custom_call.1} parent=5 // pred_region
        %s259 = ssub.s32 %s23, 1
        %s260 = sand.u32 %s59, 1
        %s261 = scalar_lea.sflag [#allocation6], %s260
        %s262 = sand.u32 %s59, 1
        %s263 = smul.addr %s262, 32
        %s264 = scalar_lea.vmem [#allocation5], %s263
        // Predicated region
        $region29: #{tpu_custom_call.1} parent=27 // pred_check
          %p265 = pneg %p72
        $region30: #{tpu_custom_call.1} parent=27 // pred_check_branch
          %267 = sbr.rel (%p265) target = $region32
        $region31: #{tpu_custom_call.1} parent=27 // pred_region
          %268 = dma.done %s261, 512
        $region32: #{tpu_custom_call.1} parent=27 // pred_fallthru
          _
        %s269 = sand.u32 %s89, 1
        %s270 = scalar_lea.sflag [#allocation9], %s269
        %s271 = sand.u32 %s89, 1
        %s272 = smul.addr %s271, 32
        %s273 = scalar_lea.vmem [#allocation8], %s272
        // Predicated region
        $region33: #{tpu_custom_call.1} parent=27 // pred_check
          %p274 = pneg %p102
        $region34: #{tpu_custom_call.1} parent=27 // pred_check_branch
          %276 = sbr.rel (%p274) target = $region36
        $region35: #{tpu_custom_call.1} parent=27 // pred_region
          %277 = dma.done %s270, 512
        $region36: #{tpu_custom_call.1} parent=27 // pred_fallthru
          _
        %s278 = sand.u32 %s59, 1
        %s279 = scalar_lea.sflag [#allocation6], %s278
        %s280 = sand.u32 %s59, 1
        %s281 = smul.addr %s280, 32
        %s282 = scalar_lea.vmem [#allocation5], %s281
        %p283 = pneg %p72
        %p284 = pneg %p69
        %s285 = sand.u32 %s89, 1
        %s286 = scalar_lea.sflag [#allocation9], %s285
        %s287 = sand.u32 %s89, 1
        %s288 = smul.addr %s287, 32
        %s289 = scalar_lea.vmem [#allocation8], %s288
        %p290 = pneg %p102
        %p291 = pneg %p99
        %p292 = pneg %p130
        %p293 = pneg %p127
        %s294 = sand.u32 %s117, 1
        %s295 = scalar_lea.sflag [#allocation7], %s294
        %s296 = sand.u32 %s117, 1
        %s297 = smul.addr %s296, 8
        %s298 = scalar_lea.vmem [#allocation10], %s297
        %p299 = pneg %p158
        %p300 = pneg %p155
        %s301 = sand.u32 %s28, 1
        %s302 = scalar_lea.sflag [#allocation12], %s301
        %s303 = sand.u32 %s145, 1
        %s304 = smul.addr %s303, 32
        %s305 = scalar_lea.vmem [#allocation11], %s304
        %p306 = pneg %p186
        %p307 = pneg %p183
        %s308 = sand.u32 %s28, 1
        %s309 = scalar_lea.sflag [#allocation12], %s308
        %s310 = sand.u32 %s173, 1
        %s311 = smul.addr %s310, 32
        %s312 = scalar_lea.vmem [#allocation13], %s311
        %s313 = sadd.s32 %s34, %s35
        %s314 = smul.u32 2, %s313
        %s315 = sadd.s32 %s34, %s35
        %s316 = smul.u32 2, %s315
        %p317 = scmp.eq.s32.totalorder %s35, 0
        // Predicated region
        $region37: #{tpu_custom_call.1} parent=27 // pred_check
          %p318 = pneg %p317
        $region38: #{tpu_custom_call.1} parent=27 // pred_check_branch
          %320 = sbr.rel (%p318) target = $region40
        $region39: #{tpu_custom_call.1} parent=27 // pred_region
          %321 = vst [vmem:[#allocation2] sm:$0xff] 0.0
          %322 = vst [vmem:[#allocation3] sm:$0xff] 0.0
          %323 = vst [vmem:[#allocation3 + $0x8] sm:$0xff] 0.0
          %324 = vst [vmem:[#allocation3 + $0x10] sm:$0xff] 0.0
          %325 = vst [vmem:[#allocation3 + $0x18] sm:$0xff] 0.0
          %326 = vst [vmem:[#allocation4] sm:$0xff] 0.0
          %327 = vst [vmem:[#allocation4 + $0x8] sm:$0xff] 0.0
          %328 = vst [vmem:[#allocation4 + $0x10] sm:$0xff] 0.0
          %329 = vst [vmem:[#allocation4 + $0x18] sm:$0xff] 0.0
        $region40: #{tpu_custom_call.1} parent=27 // pred_fallthru
          _
        %v330 = vld [vmem:[%s264] sm:$0xf]
        %v331 = vld [vmem:[%s264 + $0x4] sm:$0xf]
        %v332 = vld [vmem:[%s264 + $0x8] sm:$0xf]
        %v333 = vld [vmem:[%s264 + $0xc] sm:$0xf]
        %v334 = vld [vmem:[%s264 + $0x10] sm:$0xf]
        %v335 = vld [vmem:[%s264 + $0x14] sm:$0xf]
        %v336 = vld [vmem:[%s264 + $0x18] sm:$0xf]
        %v337 = vld [vmem:[%s264 + $0x1c] sm:$0xf]
        %v338 = vunpack.c.l.bf16 %v330
        %v339 = vunpack.c.l.bf16 %v331
        %v340 = vunpack.c.l.bf16 %v332
        %v341 = vunpack.c.l.bf16 %v333
        %v342 = vunpack.c.l.bf16 %v334
        %v343 = vunpack.c.l.bf16 %v335
        %v344 = vunpack.c.l.bf16 %v336
        %v345 = vunpack.c.l.bf16 %v337
        %v346 = vld [vmem:[%s273] sm:$0xf]
        %v347 = vld [vmem:[%s273 + $0x4] sm:$0xf]
        %v348 = vld [vmem:[%s273 + $0x8] sm:$0xf]
        %v349 = vld [vmem:[%s273 + $0xc] sm:$0xf]
        %v350 = vld [vmem:[%s273 + $0x10] sm:$0xf]
        %v351 = vld [vmem:[%s273 + $0x14] sm:$0xf]
        %v352 = vld [vmem:[%s273 + $0x18] sm:$0xf]
        %v353 = vld [vmem:[%s273 + $0x1c] sm:$0xf]
        %v354 = vunpack.c.l.bf16 %v346
        %v355 = vunpack.c.l.bf16 %v347
        %v356 = vunpack.c.l.bf16 %v348
        %v357 = vunpack.c.l.bf16 %v349
        %v358 = vunpack.c.l.bf16 %v350
        %v359 = vunpack.c.l.bf16 %v351
        %v360 = vunpack.c.l.bf16 %v352
        %v361 = vunpack.c.l.bf16 %v353
        %v362 = vmax.f32 %v338, %v342
        %v363 = vmax.f32 %v340, %v344
        %v364 = vmax.f32 %v362, %v363
        %v365 = vmax.f32 %v339, %v343
        %v366 = vmax.f32 %v341, %v345
        %v367 = vmax.f32 %v365, %v366
        %v368 = vsub.f32 %v338, %v364
        %v369 = vsub.f32 %v339, %v367
        %v370 = vsub.f32 %v340, %v364
        %v371 = vsub.f32 %v341, %v367
        %v372 = vsub.f32 %v342, %v364
        %v373 = vsub.f32 %v343, %v367
        %v374 = vsub.f32 %v344, %v364
        %v375 = vsub.f32 %v345, %v367
        %v376 = vmul.f32 %v368, 1.442695
        %v377 = vpow.pop %v376
        %v378 = vmul.f32 %v369, 1.442695
        %v379 = vpow.pop %v378
        %v380 = vmul.f32 %v370, 1.442695
        %v381 = vpow.pop %v380
        %v382 = vmul.f32 %v371, 1.442695
        %v383 = vpow.pop %v382
        %v384 = vmul.f32 %v372, 1.442695
        %v385 = vpow.pop %v384
        %v386 = vmul.f32 %v373, 1.442695
        %v387 = vpow.pop %v386
        %v388 = vmul.f32 %v374, 1.442695
        %v389 = vpow.pop %v388
        %v390 = vmul.f32 %v375, 1.442695
        %v391 = vpow.pop %v390
        %v392 = vadd.f32 %v377, %v381
        %v393 = vadd.f32 %v392, %v385
        %v394 = vadd.f32 %v393, %v389
        %v395 = vadd.f32 %v379, %v383
        %v396 = vadd.f32 %v395, %v387
        %v397 = vadd.f32 %v396, %v391
        %v398 = vlog2.pop %v394
        %v399 = vmul.f32 %v398, 0.6931472
        %v400 = vlog2.pop %v397
        %v401 = vmul.f32 %v400, 0.6931472
        %v402 = vsub.f32 %v368, %v399
        %v403 = vsub.f32 %v369, %v401
        %v404 = vsub.f32 %v370, %v399
        %v405 = vsub.f32 %v371, %v401
        %v406 = vsub.f32 %v372, %v399
        %v407 = vsub.f32 %v373, %v401
        %v408 = vsub.f32 %v374, %v399
        %v409 = vsub.f32 %v375, %v401
        %v410 = vrcp.pop %v394
        %v411 = vrcp.pop %v397
        %v412 = vmul.f32 %v377, %v410
        %v413 = vmul.f32 %v379, %v411
        %v414 = vmul.f32 %v381, %v410
        %v415 = vmul.f32 %v383, %v411
        %v416 = vmul.f32 %v385, %v410
        %v417 = vmul.f32 %v387, %v411
        %v418 = vmul.f32 %v389, %v410
        %v419 = vmul.f32 %v391, %v411
        %v420 = vld [vmem:[#allocation2] sm:$0xff]
        %v421 = vmul.f32 %v354, %v402
        %v422 = vmul.f32 %v355, %v403
        %v423 = vmul.f32 %v356, %v404
        %v424 = vmul.f32 %v357, %v405
        %v425 = vmul.f32 %v358, %v406
        %v426 = vmul.f32 %v359, %v407
        %v427 = vmul.f32 %v360, %v408
        %v428 = vmul.f32 %v361, %v409
        %v429 = vadd.f32 %v421, %v422
        %v430 = vadd.f32 %v423, %v424
        %v431 = vadd.f32 %v425, %v426
        %v432 = vadd.f32 %v427, %v428
        %v433 = vadd.f32 %v429, %v430
        %v434 = vadd.f32 %v433, %v431
        %v435 = vadd.f32 %v434, %v432
        %v436 = vsub.f32 %v420, %v435
        %437 = vst [vmem:[#allocation2] sm:$0xff] %v436
        %v438 = vld [vmem:[#allocation3] sm:$0xff]
        %v439 = vld [vmem:[#allocation3 + $0x8] sm:$0xff]
        %v440 = vld [vmem:[#allocation3 + $0x10] sm:$0xff]
        %v441 = vld [vmem:[#allocation3 + $0x18] sm:$0xff]
        %v442 = vmul.f32 %v412, %v354
        %v443 = vmul.f32 %v413, %v355
        %v444 = vmul.f32 %v414, %v356
        %v445 = vmul.f32 %v415, %v357
        %v446 = vmul.f32 %v416, %v358
        %v447 = vmul.f32 %v417, %v359
        %v448 = vmul.f32 %v418, %v360
        %v449 = vmul.f32 %v419, %v361
        %v450 = vadd.f32 %v442, %v443
        %v451 = vadd.f32 %v444, %v445
        %v452 = vadd.f32 %v446, %v447
        %v453 = vadd.f32 %v448, %v449
        %v454 = vadd.f32 %v438, %v450
        %v455 = vadd.f32 %v439, %v451
        %v456 = vadd.f32 %v440, %v452
        %v457 = vadd.f32 %v441, %v453
        %458 = vst [vmem:[#allocation3] sm:$0xff] %v454
        %459 = vst [vmem:[#allocation3 + $0x8] sm:$0xff] %v455
        %460 = vst [vmem:[#allocation3 + $0x10] sm:$0xff] %v456
        %461 = vst [vmem:[#allocation3 + $0x18] sm:$0xff] %v457
        %s462 = sadd.s32 %s34, %s35
        %s463 = smul.u32 %s462, 2048
        %s464 = sadd.s32 %s463, 2048
        %p465 = scmp.gt.s32.totalorder %s464, 256
        // Predicated region
        $region41: #{tpu_custom_call.1} parent=27 // pred_check
          %p466 = pneg %p465
        $region42: #{tpu_custom_call.1} parent=27 // pred_check_branch
          %468 = sbr.rel (%p466) target = $region44
        $region43: #{tpu_custom_call.1} parent=27 // pred_region
          %v469 = vlaneseq
          %v470 = vshrl.u32 %v469, 7
          %v471 = vadd.s32 %v470, 8
          %v472 = vlaneseq
          %v473 = vand.u32 %v472, 127
          %v474 = vmul.u32 %v470, 128
          %v475 = vmul.u32 %v471, 128
          %v476 = vstv %s463
          %v477 = vadd.s32 %v476, %v474
          %v478 = vadd.s32 %v476, %v475
          %v479 = vadd.s32 %v477, %v473
          %v480 = vadd.s32 %v478, %v473
          %vm481 = vcmp.lt.s32.totalorder %v479, 256
          %vm482 = vcmp.lt.s32.totalorder %v480, 256
          %v483 = vsel %vm481, 1, 0
          %v484 = vsel %vm482, 1, 0
          %vm485 = vcmp.eq.s32.totalorder %v483, 1
          %vm486 = vcmp.eq.s32.totalorder %v484, 1
          %v487 = vsel %vm485, %v412, 0.0
          %v488 = vsel %vm486, %v413, 0.0
          %v489 = vsel %vm485, %v414, 0.0
          %v490 = vsel %vm486, %v415, 0.0
          %v491 = vsel %vm485, %v416, 0.0
          %v492 = vsel %vm486, %v417, 0.0
          %v493 = vsel %vm485, %v418, 0.0
          %v494 = vsel %vm486, %v419, 0.0
          %v495 = vld [vmem:[#allocation4] sm:$0xff]
          %v496 = vld [vmem:[#allocation4 + $0x8] sm:$0xff]
          %v497 = vld [vmem:[#allocation4 + $0x10] sm:$0xff]
          %v498 = vld [vmem:[#allocation4 + $0x18] sm:$0xff]
          %v499 = vadd.f32 %v487, %v354
          %v500 = vadd.f32 %v488, %v355
          %v501 = vadd.f32 %v489, %v356
          %v502 = vadd.f32 %v490, %v357
          %v503 = vadd.f32 %v491, %v358
          %v504 = vadd.f32 %v492, %v359
          %v505 = vadd.f32 %v493, %v360
          %v506 = vadd.f32 %v494, %v361
          %v507 = vadd.f32 %v499, %v500
          %v508 = vadd.f32 %v501, %v502
          %v509 = vadd.f32 %v503, %v504
          %v510 = vadd.f32 %v505, %v506
          %v511 = vadd.f32 %v495, %v507
          %v512 = vadd.f32 %v496, %v508
          %v513 = vadd.f32 %v497, %v509
          %v514 = vadd.f32 %v498, %v510
          %515 = vst [vmem:[#allocation4] sm:$0xff] %v511
          %516 = vst [vmem:[#allocation4 + $0x8] sm:$0xff] %v512
          %517 = vst [vmem:[#allocation4 + $0x10] sm:$0xff] %v513
          %518 = vst [vmem:[#allocation4 + $0x18] sm:$0xff] %v514
        $region44: #{tpu_custom_call.1} parent=27 // pred_fallthru
          _
        %p519 = scmp.le.s32.totalorder %s464, 256
        // Predicated region
        $region45: #{tpu_custom_call.1} parent=27 // pred_check
          %p520 = pneg %p519
        $region46: #{tpu_custom_call.1} parent=27 // pred_check_branch
          %522 = sbr.rel (%p520) target = $region48
        $region47: #{tpu_custom_call.1} parent=27 // pred_region
          %v523 = vld [vmem:[#allocation4] sm:$0xff]
          %v524 = vld [vmem:[#allocation4 + $0x8] sm:$0xff]
          %v525 = vld [vmem:[#allocation4 + $0x10] sm:$0xff]
          %v526 = vld [vmem:[#allocation4 + $0x18] sm:$0xff]
          %v527 = vadd.f32 %v412, %v354
          %v528 = vadd.f32 %v413, %v355
          %v529 = vadd.f32 %v414, %v356
          %v530 = vadd.f32 %v415, %v357
          %v531 = vadd.f32 %v416, %v358
          %v532 = vadd.f32 %v417, %v359
          %v533 = vadd.f32 %v418, %v360
          %v534 = vadd.f32 %v419, %v361
          %v535 = vadd.f32 %v527, %v528
          %v536 = vadd.f32 %v529, %v530
          %v537 = vadd.f32 %v531, %v532
          %v538 = vadd.f32 %v533, %v534
          %v539 = vadd.f32 %v523, %v535
          %v540 = vadd.f32 %v524, %v536
          %v541 = vadd.f32 %v525, %v537
          %v542 = vadd.f32 %v526, %v538
          %543 = vst [vmem:[#allocation4] sm:$0xff] %v539
          %544 = vst [vmem:[#allocation4 + $0x8] sm:$0xff] %v540
          %545 = vst [vmem:[#allocation4 + $0x10] sm:$0xff] %v541
          %546 = vst [vmem:[#allocation4 + $0x18] sm:$0xff] %v542
        $region48: #{tpu_custom_call.1} parent=27 // pred_fallthru
          _
        // Predicated region
        $region49: #{tpu_custom_call.1} parent=27 // pred_check
          %p547 = pneg %p317
        $region50: #{tpu_custom_call.1} parent=27 // pred_check_branch
          %549 = sbr.rel (%p547) target = $region52
        $region51: #{tpu_custom_call.1} parent=27 // pred_region
          %v550 = vld [vmem:[#allocation2] sm:$0xff]
          %551 = vst [vmem:[%s298] sm:$0xff] %v550
          %v552 = vld [vmem:[#allocation3] sm:$0xff]
          %v553 = vld [vmem:[#allocation3 + $0x8] sm:$0xff]
          %v554 = vld [vmem:[#allocation3 + $0x10] sm:$0xff]
          %v555 = vld [vmem:[#allocation3 + $0x18] sm:$0xff]
          %556 = vst [vmem:[%s305] sm:$0xff] %v552
          %557 = vst [vmem:[%s305 + $0x8] sm:$0xff] %v553
          %558 = vst [vmem:[%s305 + $0x10] sm:$0xff] %v554
          %559 = vst [vmem:[%s305 + $0x18] sm:$0xff] %v555
          %v560 = vld [vmem:[#allocation4] sm:$0xff]
          %v561 = vld [vmem:[#allocation4 + $0x8] sm:$0xff]
          %v562 = vld [vmem:[#allocation4 + $0x10] sm:$0xff]
          %v563 = vld [vmem:[#allocation4 + $0x18] sm:$0xff]
          %564 = vst [vmem:[%s312] sm:$0xff] %v560
          %565 = vst [vmem:[%s312 + $0x8] sm:$0xff] %v561
          %566 = vst [vmem:[%s312 + $0x10] sm:$0xff] %v562
          %567 = vst [vmem:[%s312 + $0x18] sm:$0xff] %v563
        $region52: #{tpu_custom_call.1} parent=27 // pred_fallthru
          _
        %s568 = sand.u32 %s117, 1
        %s569 = scalar_lea.sflag [#allocation7], %s568
        %s570 = sand.u32 %s117, 1
        %s571 = smul.addr %s570, 8
        %s572 = scalar_lea.vmem [#allocation10], %s571
        %s573 = sand.u32 %s28, 1
        %s574 = scalar_lea.sflag [#allocation12], %s573
        %s575 = sand.u32 %s145, 1
        %s576 = smul.addr %s575, 32
        %s577 = scalar_lea.vmem [#allocation11], %s576
        %s578 = sand.u32 %s28, 1
        %s579 = scalar_lea.sflag [#allocation12], %s578
        %s580 = sand.u32 %s173, 1
        %s581 = smul.addr %s580, 32
        %s582 = scalar_lea.vmem [#allocation13], %s581
        // Predicated region
        $region53: #{tpu_custom_call.1} parent=27 // pred_check
          %p583 = pneg %p127
        $region54: #{tpu_custom_call.1} parent=27 // pred_check_branch
          %585 = sbr.rel (%p583) target = $region56
        $region55: #{tpu_custom_call.1} parent=27 // pred_region
          %s587 = ssub.s32 128, 128
          %588 = vsyncadd %s569, %s587
          %s589 = sadd.s32 %s34, %s33
          %s590 = smul.addr %s589, 128
          %s591 = scalar_lea.hbm %s2, %s590
          %s593 = sshll.u32 %s572, 4
          %s594 = int_to_ptr.vmem [resolvable:$true] %s593
          %596 = dma.vmem_to_hbm [thread:$0]  %s594, 128, %s591, %s569
        $region56: #{tpu_custom_call.1} parent=27 // pred_fallthru
          _
        // Predicated region
        $region57: #{tpu_custom_call.1} parent=27 // pred_check
          %p597 = pneg %p155
        $region58: #{tpu_custom_call.1} parent=27 // pred_check_branch
          %599 = sbr.rel (%p597) target = $region60
        $region59: #{tpu_custom_call.1} parent=27 // pred_region
          %s601 = ssub.s32 512, 512
          %602 = vsyncadd %s574, %s601
          %s603 = smul.addr %s34, 4
          %s604 = smul.addr %s33, 4
          %s605 = sadd.s32 %s603, %s604
          %s606 = smul.addr %s605, 128
          %s607 = scalar_lea.hbm %s3, %s606
          %s608 = sshll.u32 %s577, 4
          %s609 = int_to_ptr.vmem [resolvable:$true] %s608
          %614 = dma.vmem_to_hbm [thread:$0]  %s609, 512, %s607, %s574, 128, 128, 8
        $region60: #{tpu_custom_call.1} parent=27 // pred_fallthru
          _
        // Predicated region
        $region61: #{tpu_custom_call.1} parent=27 // pred_check
          %p615 = pneg %p183
        $region62: #{tpu_custom_call.1} parent=27 // pred_check_branch
          %617 = sbr.rel (%p615) target = $region64
        $region63: #{tpu_custom_call.1} parent=27 // pred_region
          %s619 = ssub.s32 512, 512
          %620 = vsyncadd %s579, %s619
          %s621 = smul.addr %s34, 4
          %s622 = smul.addr %s33, 4
          %s623 = sadd.s32 %s621, %s622
          %s624 = smul.addr %s623, 128
          %s625 = scalar_lea.hbm %s4, %s624
          %s626 = sshll.u32 %s582, 4
          %s627 = int_to_ptr.vmem [resolvable:$true] %s626
          %632 = dma.vmem_to_hbm [thread:$0]  %s627, 512, %s625, %s579, 128, 128, 8
        $region64: #{tpu_custom_call.1} parent=27 // pred_fallthru
          _
      $region28: #{tpu_custom_call.1} parent=5 // pred_fallthru
        _
      %p633 = scmp.le.s32.totalorder 2, %s23
      // Predicated region
      $region65: #{tpu_custom_call.1} parent=5 // pred_check
        %p634 = pneg %p633
      $region66: #{tpu_custom_call.1} parent=5 // pred_check_branch
        %636 = sbr.rel (%p634) target = $region68
      $region67: #{tpu_custom_call.1} parent=5 // pred_region
        %s637 = ssub.s32 %s23, 2
        // Predicated region
        $region69: #{tpu_custom_call.1} parent=67 // pred_check
          %p638 = pneg %p133
        $region70: #{tpu_custom_call.1} parent=67 // pred_check_branch
          %640 = sbr.rel (%p638) target = $region72
        $region71: #{tpu_custom_call.1} parent=67 // pred_region
          %s641 = sand.u32 %s118, 1
          %s642 = scalar_lea.sflag [#allocation7], %s641
          %s643 = sand.u32 %s118, 1
          %s644 = smul.addr %s643, 8
          %s645 = scalar_lea.vmem [#allocation10], %s644
          %646 = dma.done %s642, 128
        $region72: #{tpu_custom_call.1} parent=67 // pred_fallthru
          _
        // Predicated region
        $region73: #{tpu_custom_call.1} parent=67 // pred_check
          %p647 = pneg %p161
        $region74: #{tpu_custom_call.1} parent=67 // pred_check_branch
          %649 = sbr.rel (%p647) target = $region76
        $region75: #{tpu_custom_call.1} parent=67 // pred_region
          %s650 = sand.u32 %s29, 1
          %s651 = scalar_lea.sflag [#allocation12], %s650
          %s652 = sand.u32 %s146, 1
          %s653 = smul.addr %s652, 32
          %s654 = scalar_lea.vmem [#allocation11], %s653
          %655 = dma.done %s651, 512
        $region76: #{tpu_custom_call.1} parent=67 // pred_fallthru
          _
        // Predicated region
        $region77: #{tpu_custom_call.1} parent=67 // pred_check
          %p656 = pneg %p189
        $region78: #{tpu_custom_call.1} parent=67 // pred_check_branch
          %658 = sbr.rel (%p656) target = $region80
        $region79: #{tpu_custom_call.1} parent=67 // pred_region
          %s659 = sand.u32 %s29, 1
          %s660 = scalar_lea.sflag [#allocation12], %s659
          %s661 = sand.u32 %s174, 1
          %s662 = smul.addr %s661, 32
          %s663 = scalar_lea.vmem [#allocation13], %s662
          %664 = dma.done %s660, 512
        $region80: #{tpu_custom_call.1} parent=67 // pred_fallthru
          _
      $region68: #{tpu_custom_call.1} parent=5 // pred_fallthru
        _
    $region6: #{tpu_custom_call.1} parent=1 // loop_footer
      %s27 = sadd.s32 1, %s23
    $region7: #{tpu_custom_call.1} parent=1 // loop_footer_branch
      %22 = sbr.rel target = $region3
    $region8: #{tpu_custom_call.1} parent=1 // loop_exit
      _
    %665 = vsyncpa [#allocation6], 1
    %s666 = scalar_lea.sflag [#allocation6], 1
    %667 = vsyncpa %s666, 1
    %668 = vsyncpa [#allocation9], 1
    %s669 = scalar_lea.sflag [#allocation9], 1
    %670 = vsyncpa %s669, 1
    %671 = vsyncpa [#allocation7], 1
    %s672 = scalar_lea.sflag [#allocation7], 1
    %673 = vsyncpa %s672, 1
    %674 = vsyncpa [#allocation12], 1
    %s675 = scalar_lea.sflag [#allocation12], 1
    %676 = vsyncpa %s675, 1

</llo_original>
